<compile_context>
chip_gen: v7x
topology: tpu7x:2x2x1
jax: 0.10.0
libtpu: 0.0.40
codegen_flags: <defaults>
</compile_context>

<pallas_src>
import math

import jax
import jax.numpy as jnp
from jax.experimental import pallas as pl
from jax.experimental.pallas import tpu as pltpu


# ----------------------------- fused FFN kernel -----------------------------

def _ffn_kernel(x_ref, w1_ref, b1_ref, w2_ref, b2_ref, o_ref):
    """One row-tile of: o = relu(x @ w1 + b1) @ w2 + b2 (all in VMEM).

    Weights arrive in bf16; matmuls run bf16 x bf16 -> f32 on the MXU;
    bias + ReLU epilogue is done in f32 on the VPU.
    """
    xb = x_ref[...].astype(jnp.bfloat16)
    h = jnp.dot(xb, w1_ref[...], preferred_element_type=jnp.float32)
    h = jnp.maximum(h + b1_ref[...], 0.0)                       # f32 epilogue
    o = jnp.dot(h.astype(jnp.bfloat16), w2_ref[...],
                preferred_element_type=jnp.float32) + b2_ref[...]
    o_ref[...] = o.astype(o_ref.dtype)


def _round_up(x, m):
    return ((x + m - 1) // m) * m


def position_wise_forward(x, w1, b1, w2, b2, *, block_m=512):
    """Fused position-wise feed-forward. x: (..., d_model) -> (..., d_model)."""
    orig_shape = x.shape
    d_model = orig_shape[-1]
    d_ff = w1.shape[-1]
    assert w1.shape == (d_model, d_ff), w1.shape
    assert w2.shape == (d_ff, d_model), w2.shape

    m = 1
    for s in orig_shape[:-1]:
        m *= s
    x2 = x.reshape(m, d_model)                   # native dtype through the DMA
    out_dtype = x.dtype

    # Balanced row tiling: padding is at most (sublane-1) rows per tile,
    # not up to block_m-1 rows total.
    sublane = 16 if jnp.dtype(x2.dtype).itemsize == 2 else 8
    num_tiles = pl.cdiv(m, block_m)
    tm = _round_up(pl.cdiv(m, num_tiles), sublane)
    m_pad = tm * num_tiles
    if m_pad != m:
        x2 = jnp.pad(x2, ((0, m_pad - m), (0, 0)))

    # bf16 MXU operands; biases stay f32 for the epilogue.
    w1b = w1.astype(jnp.bfloat16)
    w2b = w2.astype(jnp.bfloat16)
    b1f = b1.astype(jnp.float32).reshape(1, d_ff)
    b2f = b2.astype(jnp.float32).reshape(1, d_model)

    # Derived VMEM budget: double-buffered x/out tiles, single-buffered bf16
    # weights, f32 h intermediate + bf16 copies, 1.5x slack; clamped to
    # [32 MiB, 48 MiB] so v7x (64 MiB VMEM) keeps >= 16 MiB headroom while
    # v5e/v6e get a comfortable budget.
    x_bytes = 2 * tm * d_model * jnp.dtype(x2.dtype).itemsize
    o_bytes = 2 * tm * d_model * jnp.dtype(out_dtype).itemsize
    w_bytes = 1 * (d_model * d_ff + d_ff * d_model) * 2
    b_bytes = (d_ff + d_model) * 4
    scratch = tm * d_ff * (4 + 2) + tm * d_model * 2
    vmem_bytes = int(1.5 * (x_bytes + o_bytes + w_bytes + b_bytes + scratch))
    vmem_bytes = min(max(vmem_bytes, 32 * 1024 * 1024), 48 * 1024 * 1024)

    resident = pl.Buffered(1)   # constant index_map -> one buffer is enough

    out = pl.pallas_call(
        _ffn_kernel,
        grid=(num_tiles,),
        in_specs=[
            pl.BlockSpec((tm, d_model), lambda i: (i, 0)),             # x tile
            pl.BlockSpec((d_model, d_ff), lambda i: (0, 0),
                         pipeline_mode=resident),                      # w1
            pl.BlockSpec((1, d_ff), lambda i: (0, 0),
                         pipeline_mode=resident),                      # b1
            pl.BlockSpec((d_ff, d_model), lambda i: (0, 0),
                         pipeline_mode=resident),                      # w2
            pl.BlockSpec((1, d_model), lambda i: (0, 0),
                         pipeline_mode=resident),                      # b2
        ],
        out_specs=pl.BlockSpec((tm, d_model), lambda i: (i, 0)),
        out_shape=jax.ShapeDtypeStruct((m_pad, d_model), out_dtype),
        compiler_params=pltpu.CompilerParams(
            dimension_semantics=("parallel",),
            vmem_limit_bytes=vmem_bytes,
        ),
    )(x2, w1b, b1f, w2b, b2f)

    if m_pad != m:
        out = out[:m]
    return out.reshape(orig_shape)


# ----------------------------- parameter init -------------------------------

def init_ffn_params(key, d_model, d_ff):
    """Matches nn.Linear's default init; weights stored as (d_in, d_out)."""
    k1, k2, k3, k4 = jax.random.split(key, 4)
    bound1 = 1.0 / math.sqrt(d_model)
    w1 = jax.random.uniform(k1, (d_model, d_ff), jnp.float32, -bound1, bound1)
    b1 = jax.random.uniform(k2, (d_ff,), jnp.float32, -bound1, bound1)
    bound2 = 1.0 / math.sqrt(d_ff)
    w2 = jax.random.uniform(k3, (d_ff, d_model), jnp.float32, -bound2, bound2)
    b2 = jax.random.uniform(k4, (d_model,), jnp.float32, -bound2, bound2)
    return w1, b1, w2, b2


def _reference(x, w1, b1, w2, b2):
    hp = jax.lax.Precision.HIGHEST
    h = jnp.maximum(jnp.dot(x, w1, precision=hp) + b1, 0.0)
    return jnp.dot(h, w2, precision=hp) + b2


# ----------------------------- main ------------------------------------------

if __name__ == "__main__":
    root = jax.random.PRNGKey(0)
    kx1, kp1, kx2, kp2, kx3 = jax.random.split(root, 5)

    # Small test consistent with the module: batch=2, seq=8, d_model=128, d_ff=256.
    B, S, D, DFF = 2, 8, 128, 256
    x = jax.random.normal(kx1, (B, S, D), jnp.float32)
    w1, b1, w2, b2 = init_ffn_params(kp1, D, DFF)

    fwd = jax.jit(position_wise_forward)
    out = jax.block_until_ready(fwd(x, w1, b1, w2, b2))
    assert out.shape == (B, S, D), out.shape
    assert out.dtype == jnp.float32
    ref = _reference(x.reshape(B * S, D), w1, b1, w2, b2).reshape(B, S, D)
    assert bool(jnp.allclose(out, ref, atol=1e-2, rtol=1e-2)), \
        float(jnp.max(jnp.abs(out - ref)))

    # Default-scale check (module global d_model=512, d_ff=2048). 300 rows now
    # become one 304-row tile (4 padded rows instead of 212 previously).
    D2, DFF2 = 512, 2048
    x_big = jax.random.normal(kx2, (300, D2), jnp.float32)
    p_big = init_ffn_params(kp2, D2, DFF2)
    out_big = jax.block_until_ready(jax.jit(position_wise_forward)(x_big, *p_big))
    ref_big = _reference(x_big, *p_big)
    assert out_big.shape == (300, D2), out_big.shape
    assert bool(jnp.allclose(out_big, ref_big, atol=2e-2, rtol=2e-2)), \
        float(jnp.max(jnp.abs(out_big - ref_big)))

    # Multi-tile grid check: 1100 rows -> 3 balanced 368-row tiles (parallel grid).
    x_multi = jax.random.normal(kx3, (1100, D2), jnp.float32)
    out_multi = jax.block_until_ready(jax.jit(position_wise_forward)(x_multi, *p_big))
    ref_multi = _reference(x_multi, *p_big)
    assert out_multi.shape == (1100, D2), out_multi.shape
    assert bool(jnp.allclose(out_multi, ref_multi, atol=2e-2, rtol=2e-2)), \
        float(jnp.max(jnp.abs(out_multi - ref_multi)))

    assert bool(jnp.all(jnp.isfinite(out)))
    assert bool(jnp.all(jnp.isfinite(out_big)))
    assert bool(jnp.all(jnp.isfinite(out_multi)))
    print("KERNEL_OK")
</pallas_src>

<mosaic_0001>
module attributes {stable_mosaic.version = 11 : i64} {
  func.func @_ffn_kernel(%arg0: i32, %arg1: memref<16x128xf32, #tpu.memory_space<vmem>>, %arg2: memref<128x256xbf16, #tpu.memory_space<vmem>>, %arg3: memref<1x256xf32, #tpu.memory_space<vmem>>, %arg4: memref<256x128xbf16, #tpu.memory_space<vmem>>, %arg5: memref<1x128xf32, #tpu.memory_space<vmem>>, %arg6: memref<16x128xf32, #tpu.memory_space<vmem>>) attributes {dimension_semantics = [#tpu.dimension_semantics<parallel>], iteration_bounds = array<i64: 1>, scalar_prefetch = 0 : i64, scratch_operands = 0 : i64, tpu.core_type = #tpu.core_type<tc>, window_params = [{transform_indices = @transform_0, window_bounds = array<i64: 16, 128>}, {pipeline_mode = #tpu.pipeline_mode<synchronous>, transform_indices = @transform_1, window_bounds = array<i64: 128, 256>}, {pipeline_mode = #tpu.pipeline_mode<synchronous>, transform_indices = @transform_2, window_bounds = array<i64: 1, 256>}, {pipeline_mode = #tpu.pipeline_mode<synchronous>, transform_indices = @transform_3, window_bounds = array<i64: 256, 128>}, {pipeline_mode = #tpu.pipeline_mode<synchronous>, transform_indices = @transform_4, window_bounds = array<i64: 1, 128>}, {transform_indices = @transform_5, window_bounds = array<i64: 16, 128>}]} {
    %c0 = arith.constant 0 : index
    %c0_0 = arith.constant 0 : index
    %0 = vector.load %arg1[%c0, %c0_0] : memref<16x128xf32, #tpu.memory_space<vmem>>, vector<16x128xf32>
    %1 = arith.truncf %0 : vector<16x128xf32> to vector<16x128xbf16>
    %c0_1 = arith.constant 0 : index
    %c0_2 = arith.constant 0 : index
    %2 = vector.load %arg2[%c0_1, %c0_2] : memref<128x256xbf16, #tpu.memory_space<vmem>>, vector<128x256xbf16>
    %cst = arith.constant dense<0.000000e+00> : vector<16x256xf32>
    %3 = tpu.matmul %1, %2, %cst {dimension_numbers = #tpu.dot_dimension_numbers<[1], [0], [0], [1], [0, 0, 1, 1], [], []>} : vector<16x128xbf16>, vector<128x256xbf16>, vector<16x256xf32> -> vector<16x256xf32>
    %c0_3 = arith.constant 0 : index
    %c0_4 = arith.constant 0 : index
    %4 = vector.load %arg3[%c0_3, %c0_4] : memref<1x256xf32, #tpu.memory_space<vmem>>, vector<1x256xf32>
    %5 = vector.broadcast %4 : vector<1x256xf32> to vector<16x256xf32>
    %6 = arith.addf %3, %5 : vector<16x256xf32>
    %cst_5 = arith.constant 0.000000e+00 : f32
    %7 = vector.broadcast %cst_5 : f32 to vector<16x256xf32>
    %8 = arith.maximumf %6, %7 : vector<16x256xf32>
    %9 = arith.truncf %8 : vector<16x256xf32> to vector<16x256xbf16>
    %c0_6 = arith.constant 0 : index
    %c0_7 = arith.constant 0 : index
    %10 = vector.load %arg4[%c0_6, %c0_7] : memref<256x128xbf16, #tpu.memory_space<vmem>>, vector<256x128xbf16>
    %cst_8 = arith.constant dense<0.000000e+00> : vector<16x128xf32>
    %11 = tpu.matmul %9, %10, %cst_8 {dimension_numbers = #tpu.dot_dimension_numbers<[1], [0], [0], [1], [0, 0, 1, 1], [], []>} : vector<16x256xbf16>, vector<256x128xbf16>, vector<16x128xf32> -> vector<16x128xf32>
    %c0_9 = arith.constant 0 : index
    %c0_10 = arith.constant 0 : index
    %12 = vector.load %arg5[%c0_9, %c0_10] : memref<1x128xf32, #tpu.memory_space<vmem>>, vector<1x128xf32>
    %13 = vector.broadcast %12 : vector<1x128xf32> to vector<16x128xf32>
    %14 = arith.addf %11, %13 : vector<16x128xf32>
    %c0_11 = arith.constant 0 : index
    %c0_12 = arith.constant 0 : index
    %15 = vector.load %arg6[%c0_11, %c0_12] : memref<16x128xf32, #tpu.memory_space<vmem>>, vector<16x128xf32>
    tpu.vector_store %arg6[%c0_11, %c0_12], %14 {strides = array<i32>} : memref<16x128xf32, #tpu.memory_space<vmem>>, vector<16x128xf32>,
    return
  }
  func.func @transform_0(%arg0: i32) -> (i32, i32) {
    %c0_i32 = arith.constant 0 : i32
    %c0_i32_0 = arith.constant 0 : i32
    return %arg0, %c0_i32 : i32, i32
  }
  func.func @transform_1(%arg0: i32) -> (i32, i32) {
    %c0_i32 = arith.constant 0 : i32
    %c0_i32_0 = arith.constant 0 : i32
    %c0_i32_1 = arith.constant 0 : i32
    return %c0_i32, %c0_i32_0 : i32, i32
  }
  func.func @transform_2(%arg0: i32) -> (i32, i32) {
    %c0_i32 = arith.constant 0 : i32
    %c0_i32_0 = arith.constant 0 : i32
    %c0_i32_1 = arith.constant 0 : i32
    return %c0_i32, %c0_i32_0 : i32, i32
  }
  func.func @transform_3(%arg0: i32) -> (i32, i32) {
    %c0_i32 = arith.constant 0 : i32
    %c0_i32_0 = arith.constant 0 : i32
    %c0_i32_1 = arith.constant 0 : i32
    return %c0_i32, %c0_i32_0 : i32, i32
  }
  func.func @transform_4(%arg0: i32) -> (i32, i32) {
    %c0_i32 = arith.constant 0 : i32
    %c0_i32_0 = arith.constant 0 : i32
    %c0_i32_1 = arith.constant 0 : i32
    return %c0_i32, %c0_i32_0 : i32, i32
  }
  func.func @transform_5(%arg0: i32) -> (i32, i32) {
    %c0_i32 = arith.constant 0 : i32
    %c0_i32_0 = arith.constant 0 : i32
    return %arg0, %c0_i32 : i32, i32
  }
}

</mosaic_0001>

<llo_original>
// kernel: position_wise_forward.1
$region0: #{position_wise_forward.1}
  #allocation0 [shape = 'u32[]', space=smem, size = 0x4, offset = 0x4, fixed_abs, tag = 'smem constant byte address 0x4 - core index']
  #allocation1 [shape = 'u32[144,128]{1,0:T(1,128)}', space=vmem, size = 0x12000, scoped, tag = 'internal scratch']
  %s0 = inlined_call_operand.vmem [shape: f32[16,128], index: 0, kind: input, shape index: {}]
  %s1 = inlined_call_operand.vmem [shape: bf16[128,256], index: 1, kind: input, shape index: {}]
  %s2 = inlined_call_operand.vmem [shape: f32[1,256], index: 2, kind: input, shape index: {}]
  %s3 = inlined_call_operand.vmem [shape: bf16[256,128], index: 3, kind: input, shape index: {}]
  %s4 = inlined_call_operand.vmem [shape: f32[1,128], index: 4, kind: input, shape index: {}]
  %s5 = inlined_call_operand.hbm [shape: f32[16,128], index: 5, kind: output, shape index: {}]
  %s6 = sld [smem:[#allocation0]]
  $region30: #{position_wise_forward.1} parent=0
    _
  %s8 = ssub.s32 1, %s6
  %s9 = scalar_select 0, %s8, %s6
  $region1: #{position_wise_forward.1} parent=0
    #allocation2 [shape = 'u8[8192]{0}', space=vmem, size = 0x2000, scoped, tag = 'output window, operand 0, single buffered']
    #allocation3 [shape = 's32[1]{0}', space=sflag, size = 0x4, scoped, tag = 'scoped memory for position_wise_forward.1']
    %10 = vsyncpa [#allocation3], 0
    // Predicated region
    $region2: #{position_wise_forward.1} parent=1 // pred_check
      _
    $region3: #{position_wise_forward.1} parent=1 // pred_check_branch
      %12 = sbr.rel (0) target = $region5
    $region4: #{position_wise_forward.1} parent=1 // pred_region
      _
    $region5: #{position_wise_forward.1} parent=1 // pred_fallthru
      _
    // Predicated region
    $region6: #{position_wise_forward.1} parent=1 // pred_check
      _
    $region7: #{position_wise_forward.1} parent=1 // pred_check_branch
      %14 = sbr.rel (0) target = $region9
    $region8: #{position_wise_forward.1} parent=1 // pred_region
      _
    $region9: #{position_wise_forward.1} parent=1 // pred_fallthru
      _
    // Predicated region
    $region10: #{position_wise_forward.1} parent=1 // pred_check
      _
    $region11: #{position_wise_forward.1} parent=1 // pred_check_branch
      %16 = sbr.rel (0) target = $region13
    $region12: #{position_wise_forward.1} parent=1 // pred_region
      _
    $region13: #{position_wise_forward.1} parent=1 // pred_fallthru
      _
    // Predicated region
    $region14: #{position_wise_forward.1} parent=1 // pred_check
      _
    $region15: #{position_wise_forward.1} parent=1 // pred_check_branch
      %18 = sbr.rel (0) target = $region17
    $region16: #{position_wise_forward.1} parent=1 // pred_region
      _
    $region17: #{position_wise_forward.1} parent=1 // pred_fallthru
      _
    // Predicated region
    $region18: #{position_wise_forward.1} parent=1 // pred_check
      _
    $region19: #{position_wise_forward.1} parent=1 // pred_check_branch
      %20 = sbr.rel (0) target = $region21
    $region20: #{position_wise_forward.1} parent=1 // pred_region
      _
    $region21: #{position_wise_forward.1} parent=1 // pred_fallthru
      _
    %v22 = vld [vmem:[%s0] sm:$0xff]
    %v23 = vld [vmem:[%s0 + $0x8] sm:$0xff]
    %v24 = vpack.c.bf16 %v23, %v22
    %v25 = vld [vmem:[%s1] sm:$0xff]
    %v26 = vld [vmem:[%s1 + $0x8] sm:$0xff]
    %v27 = vld [vmem:[%s1 + $0x10] sm:$0xff]
    %v28 = vld [vmem:[%s1 + $0x18] sm:$0xff]
    %v29 = vld [vmem:[%s1 + $0x20] sm:$0xff]
    %v30 = vld [vmem:[%s1 + $0x28] sm:$0xff]
    %v31 = vld [vmem:[%s1 + $0x30] sm:$0xff]
    %v32 = vld [vmem:[%s1 + $0x38] sm:$0xff]
    %v33 = vld [vmem:[%s1 + $0x40] sm:$0xff]
    %v34 = vld [vmem:[%s1 + $0x48] sm:$0xff]
    %v35 = vld [vmem:[%s1 + $0x50] sm:$0xff]
    %v36 = vld [vmem:[%s1 + $0x58] sm:$0xff]
    %v37 = vld [vmem:[%s1 + $0x60] sm:$0xff]
    %v38 = vld [vmem:[%s1 + $0x68] sm:$0xff]
    %v39 = vld [vmem:[%s1 + $0x70] sm:$0xff]
    %v40 = vld [vmem:[%s1 + $0x78] sm:$0xff]
    %v41 = vld [vmem:[%s2] sm:$0x3]
    %v43 = vlaneseq
    %v44 = vshrl.u32 %v43, 7
    %v45 = vsub.s32 0, %v44
    %v46 = vrot.slane %v41, %v45
    %v47 = vlaneseq
    %v48 = vshrl.u32 %v47, 7
    %v49 = vsub.s32 1, %v48
    %v50 = vrot.slane %v41, %v49
    %v69 = vunpack.c.l.b16 %v25
    %v70 = vunpack.c.h.b16 %v25
    %v71 = vunpack.c.l.b16 %v26
    %v72 = vunpack.c.h.b16 %v26
    %v73 = vunpack.c.l.b16 %v27
    %v74 = vunpack.c.h.b16 %v27
    %v75 = vunpack.c.l.b16 %v28
    %v76 = vunpack.c.h.b16 %v28
    %v77 = vunpack.c.l.b16 %v29
    %v78 = vunpack.c.h.b16 %v29
    %v79 = vunpack.c.l.b16 %v30
    %v80 = vunpack.c.h.b16 %v30
    %v81 = vunpack.c.l.b16 %v31
    %v82 = vunpack.c.h.b16 %v31
    %v83 = vunpack.c.l.b16 %v32
    %v84 = vunpack.c.h.b16 %v32
    %v85 = vunpack.c.l.b16 %v33
    %v86 = vunpack.c.h.b16 %v33
    %v87 = vunpack.c.l.b16 %v34
    %v88 = vunpack.c.h.b16 %v34
    %v89 = vunpack.c.l.b16 %v35
    %v90 = vunpack.c.h.b16 %v35
    %v91 = vunpack.c.l.b16 %v36
    %v92 = vunpack.c.h.b16 %v36
    %v93 = vunpack.c.l.b16 %v37
    %v94 = vunpack.c.h.b16 %v37
    %v95 = vunpack.c.l.b16 %v38
    %v96 = vunpack.c.h.b16 %v38
    %v97 = vunpack.c.l.b16 %v39
    %v98 = vunpack.c.h.b16 %v39
    %v99 = vunpack.c.l.b16 %v40
    %v100 = vunpack.c.h.b16 %v40
    %v101 = vpack.c.b16 %v71, %v69
    %v102 = vpack.c.b16 %v72, %v70
    %v103 = vpack.c.b16 %v75, %v73
    %v104 = vpack.c.b16 %v76, %v74
    %v105 = vpack.c.b16 %v79, %v77
    %v106 = vpack.c.b16 %v80, %v78
    %v107 = vpack.c.b16 %v83, %v81
    %v108 = vpack.c.b16 %v84, %v82
    %v109 = vpack.c.b16 %v87, %v85
    %v110 = vpack.c.b16 %v88, %v86
    %v111 = vpack.c.b16 %v91, %v89
    %v112 = vpack.c.b16 %v92, %v90
    %v113 = vpack.c.b16 %v95, %v93
    %v114 = vpack.c.b16 %v96, %v94
    %v115 = vpack.c.b16 %v99, %v97
    %v116 = vpack.c.b16 %v100, %v98
    %133 = vmatprep.subr.bf16.mxu0 %v102
    %134 = vmatpush1.bf16.msra.mxu0 %v101
    %135 = vmatprep.subr.bf16.mxu0 %v104
    %136 = vmatpush1.bf16.msra.mxu0 %v103
    %137 = vmatprep.subr.bf16.mxu0 %v106
    %138 = vmatpush1.bf16.msra.mxu0 %v105
    %139 = vmatprep.subr.bf16.mxu0 %v108
    %140 = vmatpush1.bf16.msra.mxu0 %v107
    %141 = vmatprep.subr.bf16.mxu0 %v110
    %142 = vmatpush1.bf16.msra.mxu0 %v109
    %143 = vmatprep.subr.bf16.mxu0 %v112
    %144 = vmatpush1.bf16.msra.mxu0 %v111
    %145 = vmatprep.subr.bf16.mxu0 %v114
    %146 = vmatpush1.bf16.msra.mxu0 %v113
    %147 = vmatprep.subr.bf16.mxu0 %v116
    %148 = vmatpush1.bf16.msra.mxu0 %v115
    %149 = vmatprep.subr.bf16.mxu0 0
    %150 = vmatpush1.bf16.msra.mxu0 0
    %151 = vmatprep.subr.bf16.mxu0 0
    %152 = vmatpush1.bf16.msra.mxu0 0
    %153 = vmatprep.subr.bf16.mxu0 0
    %154 = vmatpush1.bf16.msra.mxu0 0
    %155 = vmatprep.subr.bf16.mxu0 0
    %156 = vmatpush1.bf16.msra.mxu0 0
    %157 = vmatprep.subr.bf16.mxu0 0
    %158 = vmatpush1.bf16.msra.mxu0 0
    %159 = vmatprep.subr.bf16.mxu0 0
    %160 = vmatpush1.bf16.msra.mxu0 0
    %161 = vmatprep.subr.bf16.mxu0 0
    %162 = vmatpush1.bf16.msra.mxu0 0
    %163 = vmatprep.subr.bf16.mxu0 0
    %164 = vmatpush1.bf16.msra.mxu0 0
    %165 = vmatprep.mubr.bf16.mxu0 0
    %166 = vmatmul.mubr.bf16.gmra.mrb[0].mxu0 %v24
    %v167 = vpop.f32.mrb[0].mxu0
    %v168 = vadd.f32 %v46, %v167
    %v169 = vpop.f32.mrb[0].mxu0
    %v170 = vadd.f32 %v50, %v169
    %v171 = vpop.f32.mrb[0].mxu0
    %v172 = vadd.f32 %v46, %v171
    %v173 = vpop.f32.mrb[0].mxu0
    %v174 = vadd.f32 %v50, %v173
    %175 = vdwg.mxu0
    %v176 = vmax.f32 %v168, 0.0
    %v177 = vmax.f32 %v170, 0.0
    %v178 = vmax.f32 %v172, 0.0
    %v179 = vmax.f32 %v174, 0.0
    %v180 = vpack.c.bf16 %v178, %v176
    %v181 = vpack.c.bf16 %v179, %v177
    %v182 = vld [vmem:[%s3] sm:$0xf]
    %v183 = vld [vmem:[%s3 + $0x4] sm:$0xf]
    %v184 = vld [vmem:[%s3 + $0x8] sm:$0xf]
    %v185 = vld [vmem:[%s3 + $0xc] sm:$0xf]
    %v186 = vld [vmem:[%s3 + $0x10] sm:$0xf]
    %v187 = vld [vmem:[%s3 + $0x14] sm:$0xf]
    %v188 = vld [vmem:[%s3 + $0x18] sm:$0xf]
    %v189 = vld [vmem:[%s3 + $0x1c] sm:$0xf]
    %v190 = vld [vmem:[%s3 + $0x20] sm:$0xf]
    %v191 = vld [vmem:[%s3 + $0x24] sm:$0xf]
    %v192 = vld [vmem:[%s3 + $0x28] sm:$0xf]
    %v193 = vld [vmem:[%s3 + $0x2c] sm:$0xf]
    %v194 = vld [vmem:[%s3 + $0x30] sm:$0xf]
    %v195 = vld [vmem:[%s3 + $0x34] sm:$0xf]
    %v196 = vld [vmem:[%s3 + $0x38] sm:$0xf]
    %v197 = vld [vmem:[%s3 + $0x3c] sm:$0xf]
    %v198 = vld [vmem:[%s3 + $0x40] sm:$0xf]
    %v199 = vld [vmem:[%s3 + $0x44] sm:$0xf]
    %v200 = vld [vmem:[%s3 + $0x48] sm:$0xf]
    %v201 = vld [vmem:[%s3 + $0x4c] sm:$0xf]
    %v202 = vld [vmem:[%s3 + $0x50] sm:$0xf]
    %v203 = vld [vmem:[%s3 + $0x54] sm:$0xf]
    %v204 = vld [vmem:[%s3 + $0x58] sm:$0xf]
    %v205 = vld [vmem:[%s3 + $0x5c] sm:$0xf]
    %v206 = vld [vmem:[%s3 + $0x60] sm:$0xf]
    %v207 = vld [vmem:[%s3 + $0x64] sm:$0xf]
    %v208 = vld [vmem:[%s3 + $0x68] sm:$0xf]
    %v209 = vld [vmem:[%s3 + $0x6c] sm:$0xf]
    %v210 = vld [vmem:[%s3 + $0x70] sm:$0xf]
    %v211 = vld [vmem:[%s3 + $0x74] sm:$0xf]
    %v212 = vld [vmem:[%s3 + $0x78] sm:$0xf]
    %v213 = vld [vmem:[%s3 + $0x7c] sm:$0xf]
    %v214 = vld [vmem:[%s4] sm:$0x1]
    %v216 = vlaneseq
    %v217 = vshrl.u32 %v216, 7
    %v218 = vsub.s32 0, %v217
    %v219 = vrot.slane %v214, %v218
    %v253 = vunpack.c.l.b16 %v182
    %v254 = vunpack.c.l.b16 %v183
    %v255 = vunpack.c.l.b16 %v184
    %v256 = vunpack.c.l.b16 %v185
    %v257 = vunpack.c.l.b16 %v186
    %v258 = vunpack.c.l.b16 %v187
    %v259 = vunpack.c.l.b16 %v188
    %v260 = vunpack.c.l.b16 %v189
    %v261 = vunpack.c.l.b16 %v190
    %v262 = vunpack.c.l.b16 %v191
    %v263 = vunpack.c.l.b16 %v192
    %v264 = vunpack.c.l.b16 %v193
    %v265 = vunpack.c.l.b16 %v194
    %v266 = vunpack.c.l.b16 %v195
    %v267 = vunpack.c.l.b16 %v196
    %v268 = vunpack.c.l.b16 %v197
    %v269 = vunpack.c.l.b16 %v198
    %v270 = vunpack.c.l.b16 %v199
    %v271 = vunpack.c.l.b16 %v200
    %v272 = vunpack.c.l.b16 %v201
    %v273 = vunpack.c.l.b16 %v202
    %v274 = vunpack.c.l.b16 %v203
    %v275 = vunpack.c.l.b16 %v204
    %v276 = vunpack.c.l.b16 %v205
    %v277 = vunpack.c.l.b16 %v206
    %v278 = vunpack.c.l.b16 %v207
    %v279 = vunpack.c.l.b16 %v208
    %v280 = vunpack.c.l.b16 %v209
    %v281 = vunpack.c.l.b16 %v210
    %v282 = vunpack.c.l.b16 %v211
    %v283 = vunpack.c.l.b16 %v212
    %v284 = vunpack.c.l.b16 %v213
    %v285 = vpack.c.b16 %v254, %v253
    %v286 = vpack.c.b16 %v256, %v255
    %v287 = vpack.c.b16 %v258, %v257
    %v288 = vpack.c.b16 %v260, %v259
    %v289 = vpack.c.b16 %v262, %v261
    %v290 = vpack.c.b16 %v264, %v263
    %v291 = vpack.c.b16 %v266, %v265
    %v292 = vpack.c.b16 %v268, %v267
    %v293 = vpack.c.b16 %v270, %v269
    %v294 = vpack.c.b16 %v272, %v271
    %v295 = vpack.c.b16 %v274, %v273
    %v296 = vpack.c.b16 %v276, %v275
    %v297 = vpack.c.b16 %v278, %v277
    %v298 = vpack.c.b16 %v280, %v279
    %v299 = vpack.c.b16 %v282, %v281
    %v300 = vpack.c.b16 %v284, %v283
    %317 = vmatprep.subr.bf16.mxu0 0
    %318 = vmatpush1.bf16.msra.mxu0 %v285
    %319 = vmatprep.subr.bf16.mxu0 0
    %320 = vmatpush1.bf16.msra.mxu0 %v286
    %321 = vmatprep.subr.bf16.mxu0 0
    %322 = vmatpush1.bf16.msra.mxu0 %v287
    %323 = vmatprep.subr.bf16.mxu0 0
    %324 = vmatpush1.bf16.msra.mxu0 %v288
    %325 = vmatprep.subr.bf16.mxu0 0
    %326 = vmatpush1.bf16.msra.mxu0 %v289
    %327 = vmatprep.subr.bf16.mxu0 0
    %328 = vmatpush1.bf16.msra.mxu0 %v290
    %329 = vmatprep.subr.bf16.mxu0 0
    %330 = vmatpush1.bf16.msra.mxu0 %v291
    %331 = vmatprep.subr.bf16.mxu0 0
    %332 = vmatpush1.bf16.msra.mxu0 %v292
    %333 = vmatprep.subr.bf16.mxu0 0
    %334 = vmatpush1.bf16.msra.mxu0 %v293
    %335 = vmatprep.subr.bf16.mxu0 0
    %336 = vmatpush1.bf16.msra.mxu0 %v294
    %337 = vmatprep.subr.bf16.mxu0 0
    %338 = vmatpush1.bf16.msra.mxu0 %v295
    %339 = vmatprep.subr.bf16.mxu0 0
    %340 = vmatpush1.bf16.msra.mxu0 %v296
    %341 = vmatprep.subr.bf16.mxu0 0
    %342 = vmatpush1.bf16.msra.mxu0 %v297
    %343 = vmatprep.subr.bf16.mxu0 0
    %344 = vmatpush1.bf16.msra.mxu0 %v298
    %345 = vmatprep.subr.bf16.mxu0 0
    %346 = vmatpush1.bf16.msra.mxu0 %v299
    %347 = vmatprep.subr.bf16.mxu0 0
    %348 = vmatpush1.bf16.msra.mxu0 %v300
    %349 = vmatprep.mubr.bf16.mxu0 %v181
    %350 = vmatmul.mubr.bf16.gmra.mrb[0].mxu0 %v180
    %v351 = vpop.f32.mrb[0].mxu0
    %v352 = vadd.f32 %v219, %v351
    %v353 = vpop.f32.mrb[0].mxu0
    %v354 = vpop.f32.mrb[0].mxu0
    %v355 = vadd.f32 %v219, %v354
    %v356 = vpop.f32.mrb[0].mxu0
    %357 = vdwg.mxu0
    %358 = vst [vmem:[#allocation2] sm:$0xff] %v352
    %359 = vst [vmem:[#allocation2 + $0x8] sm:$0xff] %v355
    // Predicated region
    $region22: #{position_wise_forward.1} parent=1 // pred_check
      _
    $region23: #{position_wise_forward.1} parent=1 // pred_check_branch
      %361 = sbr.rel (0) target = $region25
    $region24: #{position_wise_forward.1} parent=1 // pred_region
      %s363 = ssub.s32 256, 256
      %364 = vsyncadd [#allocation3], %s363
      %s365 = sshll.u32 [#allocation2], 4
      %s366 = int_to_ptr.vmem [resolvable:$true] %s365
      %371 = dma.vmem_to_hbm [thread:$0]  %s366, 256, %s5, [#allocation3], 128, 128, 8
    $region25: #{position_wise_forward.1} parent=1 // pred_fallthru
      _
    // Predicated region
    $region26: #{position_wise_forward.1} parent=1 // pred_check
      _
    $region27: #{position_wise_forward.1} parent=1 // pred_check_branch
      %373 = sbr.rel (0) target = $region29
    $region28: #{position_wise_forward.1} parent=1 // pred_region
      %374 = dma.done [#allocation3], 256
    $region29: #{position_wise_forward.1} parent=1 // pred_fallthru
      _
    %375 = vsyncpa [#allocation3], 1

</llo_original>
